<compile_context>
chip_gen: v5e
topology: v5e:2x2
jax: 0.10.0
libtpu: 0.0.40
codegen_flags: <defaults>
</compile_context>

<pallas_src>
import jax
import jax.numpy as jnp
from jax.experimental import pallas as pl
from jax.experimental.pallas import tpu as pltpu

INPUT_DIM = 12
HIDDEN_DIM = 64
OUTPUT_DIM = 32
BN_EPS = 1e-5
LANE = 128


def _round_up(n, m):
    return ((n + m - 1) // m) * m


# --------------------------------------------------------------------------- #
# Kernel
# --------------------------------------------------------------------------- #
def _mlp_kernel(x_ref, w1_ref, b1_ref, w2_ref, b2_ref, w3_ref, b3_ref, o_ref):
    """Fused Linear->ReLU x3 (BNs pre-folded into w2/b2 and w3/b3)."""
    x = x_ref[...].astype(jnp.bfloat16)                                # (TB, 12)

    h = jnp.dot(x, w1_ref[...], preferred_element_type=jnp.float32) + b1_ref[...]
    h = jnp.maximum(h, 0.0)                                            # (TB, 64) f32
    # Dropout(0.3): identity in eval mode.

    h = jnp.dot(h.astype(jnp.bfloat16), w2_ref[...],
                preferred_element_type=jnp.float32) + b2_ref[...]
    h = jnp.maximum(h, 0.0)                                            # (TB, 64) f32

    out = jnp.dot(h.astype(jnp.bfloat16), w3_ref[...],
                  preferred_element_type=jnp.float32) + b3_ref[...]
    out = jnp.maximum(out, 0.0)                                        # (TB, 32) f32

    if out.shape != o_ref.shape:
        # Lane-dense packing: 4 consecutive batch rows per 128-lane output row.
        out = out.reshape(o_ref.shape)
    o_ref[...] = out.astype(o_ref.dtype)


# --------------------------------------------------------------------------- #
# pallas_call builder + wrapper
# --------------------------------------------------------------------------- #
def _build_pallas_call(tile_b, n_tiles, kp, lane_dense):
    def _const2d(arr):  # full-array block, fetched once and kept resident
        return pl.BlockSpec(arr.shape, lambda i: (0, 0))

    in_specs = [
        pl.BlockSpec((tile_b, INPUT_DIM), lambda i: (i, 0)),  # x: batch-tiled
        _const2d(kp["w1"]), _const2d(kp["b1"]),
        _const2d(kp["w2"]), _const2d(kp["b2"]),
        _const2d(kp["w3"]), _const2d(kp["b3"]),
    ]
    if lane_dense:
        rows = tile_b * OUTPUT_DIM // LANE                    # tile_b // 4
        out_shape = jax.ShapeDtypeStruct((n_tiles * rows, LANE), jnp.float32)
        out_spec = pl.BlockSpec((rows, LANE), lambda i: (i, 0))
    else:
        out_shape = jax.ShapeDtypeStruct((n_tiles * tile_b, OUTPUT_DIM), jnp.float32)
        out_spec = pl.BlockSpec((tile_b, OUTPUT_DIM), lambda i: (i, 0))

    return pl.pallas_call(
        _mlp_kernel,
        grid=(n_tiles,),
        in_specs=in_specs,
        out_specs=out_spec,
        out_shape=out_shape,
        compiler_params=pltpu.CompilerParams(
            dimension_semantics=("parallel",)),
    )


def _forward(x, kp, tile_b, lane_dense):
    B = x.shape[0]
    tb = max(8, min(_round_up(tile_b, 8), _round_up(B, 8)))
    b_pad = _round_up(B, tb)
    n_tiles = b_pad // tb
    if n_tiles > 1:
        # Multi-step grid: keep both (tb,32) and (tb*32/128,128) blocks 8-aligned.
        assert tb % 32 == 0, "tile_b must be a multiple of 32 when B > tile_b"
    if b_pad != B:
        x = jnp.pad(x, ((0, b_pad - B), (0, 0)))

    out = _build_pallas_call(tb, n_tiles, kp, lane_dense)(
        x, kp["w1"], kp["b1"], kp["w2"], kp["b2"], kp["w3"], kp["b3"])
    if lane_dense:
        out = out.reshape(b_pad, OUTPUT_DIM)   # free row-major view
    return out[:B]


def trajectory_net_forward(x, kp, tile_b=2048):
    """x: (B, INPUT_DIM) f32 -> (B, OUTPUT_DIM) f32 (eval-mode TrajectoryNet)."""
    try:
        return jax.block_until_ready(_forward(x, kp, tile_b, lane_dense=True))
    except Exception:
        # TODO(synk): lane-dense (TILE_B,32)->(TILE_B//4,128) register repack not
        # supported by this Mosaic build; fall back to masked 32-lane stores.
        return jax.block_until_ready(_forward(x, kp, tile_b, lane_dense=False))


# --------------------------------------------------------------------------- #
# Parameters (PyTorch layout) + offline BN fold + reference
# --------------------------------------------------------------------------- #
def init_torch_params(key):
    """PyTorch-layout params: Linear weight (out,in), bias (out,);
    BN gamma/beta/running_mean/running_var (H,).  Running stats are randomized
    (as after training) so the BN fold is genuinely exercised."""
    ks = jax.random.split(key, 14)

    def linear(kw, kb, fan_in, fan_out):
        bound = 1.0 / jnp.sqrt(float(fan_in))
        w = jax.random.uniform(kw, (fan_out, fan_in), jnp.float32, -bound, bound)
        b = jax.random.uniform(kb, (fan_out,), jnp.float32, -bound, bound)
        return w, b

    def bn(kg, kb, km, kv, n):
        gamma = jax.random.uniform(kg, (n,), jnp.float32, 0.5, 1.5)
        beta = 0.1 * jax.random.normal(kb, (n,), jnp.float32)
        rm = 0.1 * jax.random.normal(km, (n,), jnp.float32)
        rv = jax.random.uniform(kv, (n,), jnp.float32, 0.5, 1.5)
        return gamma, beta, rm, rv

    w1, b1 = linear(ks[0], ks[1], INPUT_DIM, HIDDEN_DIM)
    w2, b2 = linear(ks[2], ks[3], HIDDEN_DIM, HIDDEN_DIM)
    w3, b3 = linear(ks[4], ks[5], HIDDEN_DIM, OUTPUT_DIM)
    g1, be1, rm1, rv1 = bn(ks[6], ks[7], ks[8], ks[9], HIDDEN_DIM)
    g2, be2, rm2, rv2 = bn(ks[10], ks[11], ks[12], ks[13], HIDDEN_DIM)
    return dict(w1=w1, b1=b1, w2=w2, b2=b2, w3=w3, b3=b3,
                g1=g1, beta1=be1, rm1=rm1, rv1=rv1,
                g2=g2, beta2=be2, rm2=rm2, rv2=rv2)


def prepare_kernel_params(p):
    """Fold eval-mode BN into the following Linear, transpose to (in,out),
    cast weights to bf16 (biases stay f32, shaped (1, out))."""
    w1t, w2t, w3t = p["w1"].T, p["w2"].T, p["w3"].T   # (in, out)

    s1 = p["g1"] / jnp.sqrt(p["rv1"] + BN_EPS)        # BN1(h) = h*s1 + t1
    t1 = p["beta1"] - p["rm1"] * s1
    w2f = s1[:, None] * w2t
    b2f = p["b2"] + t1 @ w2t

    s2 = p["g2"] / jnp.sqrt(p["rv2"] + BN_EPS)        # BN2(h) = h*s2 + t2
    t2 = p["beta2"] - p["rm2"] * s2
    w3f = s2[:, None] * w3t
    b3f = p["b3"] + t2 @ w3t

    return {
        "w1": w1t.astype(jnp.bfloat16), "b1": p["b1"].reshape(1, -1).astype(jnp.float32),
        "w2": w2f.astype(jnp.bfloat16), "b2": b2f.reshape(1, -1).astype(jnp.float32),
        "w3": w3f.astype(jnp.bfloat16), "b3": b3f.reshape(1, -1).astype(jnp.float32),
    }


def reference_forward(x, p):
    """Plain-JAX f32 reference with explicit eval-mode BN (PyTorch semantics)."""
    h = jnp.maximum(x @ p["w1"].T + p["b1"], 0.0)
    h = (h - p["rm1"]) / jnp.sqrt(p["rv1"] + BN_EPS) * p["g1"] + p["beta1"]
    h = jnp.maximum(h @ p["w2"].T + p["b2"], 0.0)
    h = (h - p["rm2"]) / jnp.sqrt(p["rv2"] + BN_EPS) * p["g2"] + p["beta2"]
    return jnp.maximum(h @ p["w3"].T + p["b3"], 0.0)


# --------------------------------------------------------------------------- #
if __name__ == "__main__":
    key = jax.random.PRNGKey(0)
    k_params, k_x1, k_x2 = jax.random.split(key, 3)

    raw = init_torch_params(k_params)
    kp = prepare_kernel_params(raw)

    # Small batch (single grid step).
    B = 8
    x = jax.random.normal(k_x1, (B, INPUT_DIM), jnp.float32)
    out = trajectory_net_forward(x, kp)
    out = jax.block_until_ready(out)
    ref = reference_forward(x, raw)
    assert out.shape == (B, OUTPUT_DIM)
    assert jnp.allclose(out, ref, atol=5e-2, rtol=5e-2), "mismatch vs reference (B=8)"

    # Multi-tile grid + batch padding path (B=80, TILE_B=32 -> 3 grid steps).
    B2 = 80
    x2 = jax.random.normal(k_x2, (B2, INPUT_DIM), jnp.float32)
    out2 = jax.block_until_ready(trajectory_net_forward(x2, kp, tile_b=32))
    ref2 = reference_forward(x2, raw)
    assert out2.shape == (B2, OUTPUT_DIM)
    assert jnp.allclose(out2, ref2, atol=5e-2, rtol=5e-2), "mismatch vs reference (B=80)"

    print("KERNEL_OK")
</pallas_src>

<mosaic_0001>
module attributes {stable_mosaic.version = 11 : i64} {
  func.func @_mlp_kernel(%arg0: i32, %arg1: memref<8x12xf32, #tpu.memory_space<vmem>>, %arg2: memref<12x64xbf16, #tpu.memory_space<vmem>>, %arg3: memref<1x64xf32, #tpu.memory_space<vmem>>, %arg4: memref<64x64xbf16, #tpu.memory_space<vmem>>, %arg5: memref<1x64xf32, #tpu.memory_space<vmem>>, %arg6: memref<64x32xbf16, #tpu.memory_space<vmem>>, %arg7: memref<1x32xf32, #tpu.memory_space<vmem>>, %arg8: memref<2x128xf32, #tpu.memory_space<vmem>>) attributes {dimension_semantics = [#tpu.dimension_semantics<parallel>], iteration_bounds = array<i64: 1>, scalar_prefetch = 0 : i64, scratch_operands = 0 : i64, tpu.core_type = #tpu.core_type<tc>, window_params = [{transform_indices = @transform_0, window_bounds = array<i64: 8, 12>}, {pipeline_mode = #tpu.pipeline_mode<synchronous>, transform_indices = @transform_1, window_bounds = array<i64: 12, 64>}, {pipeline_mode = #tpu.pipeline_mode<synchronous>, transform_indices = @transform_2, window_bounds = array<i64: 1, 64>}, {pipeline_mode = #tpu.pipeline_mode<synchronous>, transform_indices = @transform_3, window_bounds = array<i64: 64, 64>}, {pipeline_mode = #tpu.pipeline_mode<synchronous>, transform_indices = @transform_4, window_bounds = array<i64: 1, 64>}, {pipeline_mode = #tpu.pipeline_mode<synchronous>, transform_indices = @transform_5, window_bounds = array<i64: 64, 32>}, {pipeline_mode = #tpu.pipeline_mode<synchronous>, transform_indices = @transform_6, window_bounds = array<i64: 1, 32>}, {transform_indices = @transform_7, window_bounds = array<i64: 2, 128>}]} {
    %c0 = arith.constant 0 : index
    %c0_0 = arith.constant 0 : index
    %0 = vector.load %arg1[%c0, %c0_0] : memref<8x12xf32, #tpu.memory_space<vmem>>, vector<8x12xf32>
    %1 = arith.truncf %0 : vector<8x12xf32> to vector<8x12xbf16>
    %c0_1 = arith.constant 0 : index
    %c0_2 = arith.constant 0 : index
    %2 = vector.load %arg2[%c0_1, %c0_2] : memref<12x64xbf16, #tpu.memory_space<vmem>>, vector<12x64xbf16>
    %cst = arith.constant dense<0.000000e+00> : vector<8x64xf32>
    %3 = tpu.matmul %1, %2, %cst {dimension_numbers = #tpu.dot_dimension_numbers<[1], [0], [0], [1], [0, 0, 1, 1], [], []>} : vector<8x12xbf16>, vector<12x64xbf16>, vector<8x64xf32> -> vector<8x64xf32>
    %c0_3 = arith.constant 0 : index
    %c0_4 = arith.constant 0 : index
    %4 = vector.load %arg3[%c0_3, %c0_4] : memref<1x64xf32, #tpu.memory_space<vmem>>, vector<1x64xf32>
    %5 = vector.broadcast %4 : vector<1x64xf32> to vector<8x64xf32>
    %6 = arith.addf %3, %5 : vector<8x64xf32>
    %cst_5 = arith.constant 0.000000e+00 : f32
    %7 = vector.broadcast %cst_5 : f32 to vector<8x64xf32>
    %8 = arith.maximumf %6, %7 : vector<8x64xf32>
    %9 = arith.truncf %8 : vector<8x64xf32> to vector<8x64xbf16>
    %c0_6 = arith.constant 0 : index
    %c0_7 = arith.constant 0 : index
    %10 = vector.load %arg4[%c0_6, %c0_7] : memref<64x64xbf16, #tpu.memory_space<vmem>>, vector<64x64xbf16>
    %cst_8 = arith.constant dense<0.000000e+00> : vector<8x64xf32>
    %11 = tpu.matmul %9, %10, %cst_8 {dimension_numbers = #tpu.dot_dimension_numbers<[1], [0], [0], [1], [0, 0, 1, 1], [], []>} : vector<8x64xbf16>, vector<64x64xbf16>, vector<8x64xf32> -> vector<8x64xf32>
    %c0_9 = arith.constant 0 : index
    %c0_10 = arith.constant 0 : index
    %12 = vector.load %arg5[%c0_9, %c0_10] : memref<1x64xf32, #tpu.memory_space<vmem>>, vector<1x64xf32>
    %13 = vector.broadcast %12 : vector<1x64xf32> to vector<8x64xf32>
    %14 = arith.addf %11, %13 : vector<8x64xf32>
    %cst_11 = arith.constant 0.000000e+00 : f32
    %15 = vector.broadcast %cst_11 : f32 to vector<8x64xf32>
    %16 = arith.maximumf %14, %15 : vector<8x64xf32>
    %17 = arith.truncf %16 : vector<8x64xf32> to vector<8x64xbf16>
    %c0_12 = arith.constant 0 : index
    %c0_13 = arith.constant 0 : index
    %18 = vector.load %arg6[%c0_12, %c0_13] : memref<64x32xbf16, #tpu.memory_space<vmem>>, vector<64x32xbf16>
    %cst_14 = arith.constant dense<0.000000e+00> : vector<8x32xf32>
    %19 = tpu.matmul %17, %18, %cst_14 {dimension_numbers = #tpu.dot_dimension_numbers<[1], [0], [0], [1], [0, 0, 1, 1], [], []>} : vector<8x64xbf16>, vector<64x32xbf16>, vector<8x32xf32> -> vector<8x32xf32>
    %c0_15 = arith.constant 0 : index
    %c0_16 = arith.constant 0 : index
    %20 = vector.load %arg7[%c0_15, %c0_16] : memref<1x32xf32, #tpu.memory_space<vmem>>, vector<1x32xf32>
    %21 = vector.broadcast %20 : vector<1x32xf32> to vector<8x32xf32>
    %22 = arith.addf %19, %21 : vector<8x32xf32>
    %cst_17 = arith.constant 0.000000e+00 : f32
    %23 = vector.broadcast %cst_17 : f32 to vector<8x32xf32>
    %24 = arith.maximumf %22, %23 : vector<8x32xf32>
    %25 = vector.shape_cast %24 : vector<8x32xf32> to vector<2x128xf32>
    %c0_18 = arith.constant 0 : index
    %c0_19 = arith.constant 0 : index
    %26 = vector.load %arg8[%c0_18, %c0_19] : memref<2x128xf32, #tpu.memory_space<vmem>>, vector<2x128xf32>
    tpu.vector_store %arg8[%c0_18, %c0_19], %25 {strides = array<i32>} : memref<2x128xf32, #tpu.memory_space<vmem>>, vector<2x128xf32>,
    return
  }
  func.func @transform_0(%arg0: i32) -> (i32, i32) {
    %c0_i32 = arith.constant 0 : i32
    %c0_i32_0 = arith.constant 0 : i32
    return %arg0, %c0_i32 : i32, i32
  }
  func.func @transform_1(%arg0: i32) -> (i32, i32) {
    %c0_i32 = arith.constant 0 : i32
    %c0_i32_0 = arith.constant 0 : i32
    %c0_i32_1 = arith.constant 0 : i32
    return %c0_i32, %c0_i32_0 : i32, i32
  }
  func.func @transform_2(%arg0: i32) -> (i32, i32) {
    %c0_i32 = arith.constant 0 : i32
    %c0_i32_0 = arith.constant 0 : i32
    %c0_i32_1 = arith.constant 0 : i32
    return %c0_i32, %c0_i32_0 : i32, i32
  }
  func.func @transform_3(%arg0: i32) -> (i32, i32) {
    %c0_i32 = arith.constant 0 : i32
    %c0_i32_0 = arith.constant 0 : i32
    %c0_i32_1 = arith.constant 0 : i32
    return %c0_i32, %c0_i32_0 : i32, i32
  }
  func.func @transform_4(%arg0: i32) -> (i32, i32) {
    %c0_i32 = arith.constant 0 : i32
    %c0_i32_0 = arith.constant 0 : i32
    %c0_i32_1 = arith.constant 0 : i32
    return %c0_i32, %c0_i32_0 : i32, i32
  }
  func.func @transform_5(%arg0: i32) -> (i32, i32) {
    %c0_i32 = arith.constant 0 : i32
    %c0_i32_0 = arith.constant 0 : i32
    %c0_i32_1 = arith.constant 0 : i32
    return %c0_i32, %c0_i32_0 : i32, i32
  }
  func.func @transform_6(%arg0: i32) -> (i32, i32) {
    %c0_i32 = arith.constant 0 : i32
    %c0_i32_0 = arith.constant 0 : i32
    %c0_i32_1 = arith.constant 0 : i32
    return %c0_i32, %c0_i32_0 : i32, i32
  }
  func.func @transform_7(%arg0: i32) -> (i32, i32) {
    %c0_i32 = arith.constant 0 : i32
    %c0_i32_0 = arith.constant 0 : i32
    return %arg0, %c0_i32 : i32, i32
  }
}

module attributes {stable_mosaic.version = 11 : i64} {
  func.func @_mlp_kernel(%arg0: i32, %arg1: memref<8x12xf32, #tpu.memory_space<vmem>>, %arg2: memref<12x64xbf16, #tpu.memory_space<vmem>>, %arg3: memref<1x64xf32, #tpu.memory_space<vmem>>, %arg4: memref<64x64xbf16, #tpu.memory_space<vmem>>, %arg5: memref<1x64xf32, #tpu.memory_space<vmem>>, %arg6: memref<64x32xbf16, #tpu.memory_space<vmem>>, %arg7: memref<1x32xf32, #tpu.memory_space<vmem>>, %arg8: memref<8x32xf32, #tpu.memory_space<vmem>>) attributes {dimension_semantics = [#tpu.dimension_semantics<parallel>], iteration_bounds = array<i64: 1>, scalar_prefetch = 0 : i64, scratch_operands = 0 : i64, tpu.core_type = #tpu.core_type<tc>, window_params = [{transform_indices = @transform_0, window_bounds = array<i64: 8, 12>}, {pipeline_mode = #tpu.pipeline_mode<synchronous>, transform_indices = @transform_1, window_bounds = array<i64: 12, 64>}, {pipeline_mode = #tpu.pipeline_mode<synchronous>, transform_indices = @transform_2, window_bounds = array<i64: 1, 64>}, {pipeline_mode = #tpu.pipeline_mode<synchronous>, transform_indices = @transform_3, window_bounds = array<i64: 64, 64>}, {pipeline_mode = #tpu.pipeline_mode<synchronous>, transform_indices = @transform_4, window_bounds = array<i64: 1, 64>}, {pipeline_mode = #tpu.pipeline_mode<synchronous>, transform_indices = @transform_5, window_bounds = array<i64: 64, 32>}, {pipeline_mode = #tpu.pipeline_mode<synchronous>, transform_indices = @transform_6, window_bounds = array<i64: 1, 32>}, {transform_indices = @transform_7, window_bounds = array<i64: 8, 32>}]} {
    %c0 = arith.constant 0 : index
    %c0_0 = arith.constant 0 : index
    %0 = vector.load %arg1[%c0, %c0_0] : memref<8x12xf32, #tpu.memory_space<vmem>>, vector<8x12xf32>
    %1 = arith.truncf %0 : vector<8x12xf32> to vector<8x12xbf16>
    %c0_1 = arith.constant 0 : index
    %c0_2 = arith.constant 0 : index
    %2 = vector.load %arg2[%c0_1, %c0_2] : memref<12x64xbf16, #tpu.memory_space<vmem>>, vector<12x64xbf16>
    %cst = arith.constant dense<0.000000e+00> : vector<8x64xf32>
    %3 = tpu.matmul %1, %2, %cst {dimension_numbers = #tpu.dot_dimension_numbers<[1], [0], [0], [1], [0, 0, 1, 1], [], []>} : vector<8x12xbf16>, vector<12x64xbf16>, vector<8x64xf32> -> vector<8x64xf32>
    %c0_3 = arith.constant 0 : index
    %c0_4 = arith.constant 0 : index
    %4 = vector.load %arg3[%c0_3, %c0_4] : memref<1x64xf32, #tpu.memory_space<vmem>>, vector<1x64xf32>
    %5 = vector.broadcast %4 : vector<1x64xf32> to vector<8x64xf32>
    %6 = arith.addf %3, %5 : vector<8x64xf32>
    %cst_5 = arith.constant 0.000000e+00 : f32
    %7 = vector.broadcast %cst_5 : f32 to vector<8x64xf32>
    %8 = arith.maximumf %6, %7 : vector<8x64xf32>
    %9 = arith.truncf %8 : vector<8x64xf32> to vector<8x64xbf16>
    %c0_6 = arith.constant 0 : index
    %c0_7 = arith.constant 0 : index
    %10 = vector.load %arg4[%c0_6, %c0_7] : memref<64x64xbf16, #tpu.memory_space<vmem>>, vector<64x64xbf16>
    %cst_8 = arith.constant dense<0.000000e+00> : vector<8x64xf32>
    %11 = tpu.matmul %9, %10, %cst_8 {dimension_numbers = #tpu.dot_dimension_numbers<[1], [0], [0], [1], [0, 0, 1, 1], [], []>} : vector<8x64xbf16>, vector<64x64xbf16>, vector<8x64xf32> -> vector<8x64xf32>
    %c0_9 = arith.constant 0 : index
    %c0_10 = arith.constant 0 : index
    %12 = vector.load %arg5[%c0_9, %c0_10] : memref<1x64xf32, #tpu.memory_space<vmem>>, vector<1x64xf32>
    %13 = vector.broadcast %12 : vector<1x64xf32> to vector<8x64xf32>
    %14 = arith.addf %11, %13 : vector<8x64xf32>
    %cst_11 = arith.constant 0.000000e+00 : f32
    %15 = vector.broadcast %cst_11 : f32 to vector<8x64xf32>
    %16 = arith.maximumf %14, %15 : vector<8x64xf32>
    %17 = arith.truncf %16 : vector<8x64xf32> to vector<8x64xbf16>
    %c0_12 = arith.constant 0 : index
    %c0_13 = arith.constant 0 : index
    %18 = vector.load %arg6[%c0_12, %c0_13] : memref<64x32xbf16, #tpu.memory_space<vmem>>, vector<64x32xbf16>
    %cst_14 = arith.constant dense<0.000000e+00> : vector<8x32xf32>
    %19 = tpu.matmul %17, %18, %cst_14 {dimension_numbers = #tpu.dot_dimension_numbers<[1], [0], [0], [1], [0, 0, 1, 1], [], []>} : vector<8x64xbf16>, vector<64x32xbf16>, vector<8x32xf32> -> vector<8x32xf32>
    %c0_15 = arith.constant 0 : index
    %c0_16 = arith.constant 0 : index
    %20 = vector.load %arg7[%c0_15, %c0_16] : memref<1x32xf32, #tpu.memory_space<vmem>>, vector<1x32xf32>
    %21 = vector.broadcast %20 : vector<1x32xf32> to vector<8x32xf32>
    %22 = arith.addf %19, %21 : vector<8x32xf32>
    %cst_17 = arith.constant 0.000000e+00 : f32
    %23 = vector.broadcast %cst_17 : f32 to vector<8x32xf32>
    %24 = arith.maximumf %22, %23 : vector<8x32xf32>
    %c0_18 = arith.constant 0 : index
    %c0_19 = arith.constant 0 : index
    %25 = vector.load %arg8[%c0_18, %c0_19] : memref<8x32xf32, #tpu.memory_space<vmem>>, vector<8x32xf32>
    tpu.vector_store %arg8[%c0_18, %c0_19], %24 {strides = array<i32>} : memref<8x32xf32, #tpu.memory_space<vmem>>, vector<8x32xf32>,
    return
  }
  func.func @transform_0(%arg0: i32) -> (i32, i32) {
    %c0_i32 = arith.constant 0 : i32
    %c0_i32_0 = arith.constant 0 : i32
    return %arg0, %c0_i32 : i32, i32
  }
  func.func @transform_1(%arg0: i32) -> (i32, i32) {
    %c0_i32 = arith.constant 0 : i32
    %c0_i32_0 = arith.constant 0 : i32
    %c0_i32_1 = arith.constant 0 : i32
    return %c0_i32, %c0_i32_0 : i32, i32
  }
  func.func @transform_2(%arg0: i32) -> (i32, i32) {
    %c0_i32 = arith.constant 0 : i32
    %c0_i32_0 = arith.constant 0 : i32
    %c0_i32_1 = arith.constant 0 : i32
    return %c0_i32, %c0_i32_0 : i32, i32
  }
  func.func @transform_3(%arg0: i32) -> (i32, i32) {
    %c0_i32 = arith.constant 0 : i32
    %c0_i32_0 = arith.constant 0 : i32
    %c0_i32_1 = arith.constant 0 : i32
    return %c0_i32, %c0_i32_0 : i32, i32
  }
  func.func @transform_4(%arg0: i32) -> (i32, i32) {
    %c0_i32 = arith.constant 0 : i32
    %c0_i32_0 = arith.constant 0 : i32
    %c0_i32_1 = arith.constant 0 : i32
    return %c0_i32, %c0_i32_0 : i32, i32
  }
  func.func @transform_5(%arg0: i32) -> (i32, i32) {
    %c0_i32 = arith.constant 0 : i32
    %c0_i32_0 = arith.constant 0 : i32
    %c0_i32_1 = arith.constant 0 : i32
    return %c0_i32, %c0_i32_0 : i32, i32
  }
  func.func @transform_6(%arg0: i32) -> (i32, i32) {
    %c0_i32 = arith.constant 0 : i32
    %c0_i32_0 = arith.constant 0 : i32
    %c0_i32_1 = arith.constant 0 : i32
    return %c0_i32, %c0_i32_0 : i32, i32
  }
  func.func @transform_7(%arg0: i32) -> (i32, i32) {
    %c0_i32 = arith.constant 0 : i32
    %c0_i32_0 = arith.constant 0 : i32
    return %arg0, %c0_i32 : i32, i32
  }
}

</mosaic_0001>

<llo_original>
// kernel: tpu_custom_call.1
$region0: #{tpu_custom_call.1}
  #allocation0 [shape = 'u32[]', space=smem, size = 0x4, offset = 0x4, fixed_abs, tag = 'smem constant byte address 0x4 - core index']
  #allocation1 [shape = 'u32[72,128]{1,0:T(1,128)}', space=vmem, size = 0x9000, scoped, tag = 'internal scratch']
  %s0 = inlined_call_operand.vmem [shape: f32[8,12], index: 0, kind: input, shape index: {}]
  %s1 = inlined_call_operand.vmem [shape: bf16[12,64], index: 1, kind: input, shape index: {}]
  %s2 = inlined_call_operand.vmem [shape: f32[1,64], index: 2, kind: input, shape index: {}]
  %s3 = inlined_call_operand.vmem [shape: bf16[64,64], index: 3, kind: input, shape index: {}]
  %s4 = inlined_call_operand.vmem [shape: f32[1,64], index: 4, kind: input, shape index: {}]
  %s5 = inlined_call_operand.vmem [shape: bf16[64,32], index: 5, kind: input, shape index: {}]
  %s6 = inlined_call_operand.vmem [shape: f32[1,32], index: 6, kind: input, shape index: {}]
  %s7 = inlined_call_operand.hbm [shape: f32[8,32], index: 7, kind: output, shape index: {}]
  %s8 = sld [smem:[#allocation0]]
  $region38: #{tpu_custom_call.1} parent=0
    _
  %s10 = ssub.s32 1, %s8
  %s11 = scalar_select 0, %s10, %s8
  $region1: #{tpu_custom_call.1} parent=0
    #allocation2 [shape = 'u8[4096]{0}', space=vmem, size = 0x1000, scoped, tag = 'output window, operand 0, single buffered']
    #allocation3 [shape = 's32[1]{0}', space=sflag, size = 0x4, scoped, tag = 'scoped memory for tpu_custom_call.1']
    %12 = vsyncpa [#allocation3], 0
    // Predicated region
    $region2: #{tpu_custom_call.1} parent=1 // pred_check
      _
    $region3: #{tpu_custom_call.1} parent=1 // pred_check_branch
      %14 = sbr.rel (0) target = $region5
    $region4: #{tpu_custom_call.1} parent=1 // pred_region
      _
    $region5: #{tpu_custom_call.1} parent=1 // pred_fallthru
      _
    // Predicated region
    $region6: #{tpu_custom_call.1} parent=1 // pred_check
      _
    $region7: #{tpu_custom_call.1} parent=1 // pred_check_branch
      %16 = sbr.rel (0) target = $region9
    $region8: #{tpu_custom_call.1} parent=1 // pred_region
      _
    $region9: #{tpu_custom_call.1} parent=1 // pred_fallthru
      _
    // Predicated region
    $region10: #{tpu_custom_call.1} parent=1 // pred_check
      _
    $region11: #{tpu_custom_call.1} parent=1 // pred_check_branch
      %18 = sbr.rel (0) target = $region13
    $region12: #{tpu_custom_call.1} parent=1 // pred_region
      _
    $region13: #{tpu_custom_call.1} parent=1 // pred_fallthru
      _
    // Predicated region
    $region14: #{tpu_custom_call.1} parent=1 // pred_check
      _
    $region15: #{tpu_custom_call.1} parent=1 // pred_check_branch
      %20 = sbr.rel (0) target = $region17
    $region16: #{tpu_custom_call.1} parent=1 // pred_region
      _
    $region17: #{tpu_custom_call.1} parent=1 // pred_fallthru
      _
    // Predicated region
    $region18: #{tpu_custom_call.1} parent=1 // pred_check
      _
    $region19: #{tpu_custom_call.1} parent=1 // pred_check_branch
      %22 = sbr.rel (0) target = $region21
    $region20: #{tpu_custom_call.1} parent=1 // pred_region
      _
    $region21: #{tpu_custom_call.1} parent=1 // pred_fallthru
      _
    // Predicated region
    $region22: #{tpu_custom_call.1} parent=1 // pred_check
      _
    $region23: #{tpu_custom_call.1} parent=1 // pred_check_branch
      %24 = sbr.rel (0) target = $region25
    $region24: #{tpu_custom_call.1} parent=1 // pred_region
      _
    $region25: #{tpu_custom_call.1} parent=1 // pred_fallthru
      _
    // Predicated region
    $region26: #{tpu_custom_call.1} parent=1 // pred_check
      _
    $region27: #{tpu_custom_call.1} parent=1 // pred_check_branch
      %26 = sbr.rel (0) target = $region29
    $region28: #{tpu_custom_call.1} parent=1 // pred_region
      _
    $region29: #{tpu_custom_call.1} parent=1 // pred_fallthru
      _
    %v28 = vld [vmem:[%s0] sm:$0xff]
    %v29 = vpack.c.bf16 %v28, %v28
    %v30 = vld [vmem:[%s1] sm:$0xf]
    %v31 = vld [vmem:[%s1 + $0x4] sm:$0x3]
    %v32 = vld [vmem:[%s2] sm:$0x1]
    %v34 = vperm.slane %v32, 0
    %v38 = vunpack.c.l.b16 %v30
    %v39 = vunpack.c.l.b16 %v31
    %v40 = vpack.c.b16 %v39, %v38
    %vm41 = vcmask 97280
    %v43 = vsel %vm41, %v29, 0
    %vm45 = vcmask 1045504
    %v47 = vsel %vm45, %v40, 0
    %49 = vmatpush.bf16.msra.mxu0 0
    %50 = vmatpush.bf16.msra.mxu0 0
    %51 = vmatpush.bf16.msra.mxu0 0
    %52 = vmatpush.bf16.msra.mxu0 0
    %53 = vmatpush.bf16.msra.mxu0 0
    %54 = vmatpush.bf16.msra.mxu0 0
    %55 = vmatpush.bf16.msra.mxu0 0
    %56 = vmatpush.bf16.msra.mxu0 %v47
    %57 = vmatmul.bf16.gmra.mxu0 %v43
    %v58 = vpop.f32.mrf.mxu0
    %v59 = vadd.f32 %v34, %v58
    %v60 = vpop.f32.mrf.mxu0
    %61 = vdwg.mxu0
    %v62 = vmax.f32 %v59, 0.0
    %v63 = vpack.c.bf16 %v62, %v62
    %v64 = vld [vmem:[%s3] sm:$0xf]
    %v65 = vld [vmem:[%s3 + $0x4] sm:$0xf]
    %v66 = vld [vmem:[%s3 + $0x8] sm:$0xf]
    %v67 = vld [vmem:[%s3 + $0xc] sm:$0xf]
    %v68 = vld [vmem:[%s3 + $0x10] sm:$0xf]
    %v69 = vld [vmem:[%s3 + $0x14] sm:$0xf]
    %v70 = vld [vmem:[%s3 + $0x18] sm:$0xf]
    %v71 = vld [vmem:[%s3 + $0x1c] sm:$0xf]
    %v72 = vld [vmem:[%s4] sm:$0x1]
    %v74 = vperm.slane %v72, 0
    %v84 = vunpack.c.l.b16 %v64
    %v85 = vunpack.c.l.b16 %v65
    %v86 = vunpack.c.l.b16 %v66
    %v87 = vunpack.c.l.b16 %v67
    %v88 = vunpack.c.l.b16 %v68
    %v89 = vunpack.c.l.b16 %v69
    %v90 = vunpack.c.l.b16 %v70
    %v91 = vunpack.c.l.b16 %v71
    %v92 = vpack.c.b16 %v85, %v84
    %v93 = vpack.c.b16 %v87, %v86
    %v94 = vpack.c.b16 %v89, %v88
    %v95 = vpack.c.b16 %v91, %v90
    %vm100 = vcmask 523264
    %v102 = vsel %vm100, %v63, 0
    %104 = vmatpush.bf16.msra.mxu0 0
    %105 = vmatpush.bf16.msra.mxu0 0
    %106 = vmatpush.bf16.msra.mxu0 0
    %107 = vmatpush.bf16.msra.mxu0 0
    %108 = vmatpush.bf16.msra.mxu0 %v95
    %109 = vmatpush.bf16.msra.mxu0 %v94
    %110 = vmatpush.bf16.msra.mxu0 %v93
    %111 = vmatpush.bf16.msra.mxu0 %v92
    %112 = vmatmul.bf16.gmra.mxu0 %v102
    %v113 = vpop.f32.mrf.mxu0
    %v114 = vadd.f32 %v74, %v113
    %v115 = vpop.f32.mrf.mxu0
    %116 = vdwg.mxu0
    %v117 = vmax.f32 %v114, 0.0
    %v118 = vpack.c.bf16 %v117, %v117
    %v119 = vld [vmem:[%s5] sm:$0xf]
    %v120 = vld [vmem:[%s5 + $0x4] sm:$0xf]
    %v121 = vld [vmem:[%s5 + $0x8] sm:$0xf]
    %v122 = vld [vmem:[%s5 + $0xc] sm:$0xf]
    %v123 = vld [vmem:[%s5 + $0x10] sm:$0xf]
    %v124 = vld [vmem:[%s5 + $0x14] sm:$0xf]
    %v125 = vld [vmem:[%s5 + $0x18] sm:$0xf]
    %v126 = vld [vmem:[%s5 + $0x1c] sm:$0xf]
    %v127 = vld [vmem:[%s6] sm:$0x1]
    %v129 = vperm.slane %v127, 0
    %v139 = vunpack.c.l.b16 %v119
    %v140 = vunpack.c.l.b16 %v120
    %v141 = vunpack.c.l.b16 %v121
    %v142 = vunpack.c.l.b16 %v122
    %v143 = vunpack.c.l.b16 %v123
    %v144 = vunpack.c.l.b16 %v124
    %v145 = vunpack.c.l.b16 %v125
    %v146 = vunpack.c.l.b16 %v126
    %v147 = vpack.c.b16 %v140, %v139
    %v148 = vpack.c.b16 %v142, %v141
    %v149 = vpack.c.b16 %v144, %v143
    %v150 = vpack.c.b16 %v146, %v145
    %v156 = vsel %vm100, %v118, 0
    %158 = vmatpush.bf16.msra.mxu0 0
    %159 = vmatpush.bf16.msra.mxu0 0
    %160 = vmatpush.bf16.msra.mxu0 0
    %161 = vmatpush.bf16.msra.mxu0 0
    %162 = vmatpush.bf16.msra.mxu0 %v150
    %163 = vmatpush.bf16.msra.mxu0 %v149
    %164 = vmatpush.bf16.msra.mxu0 %v148
    %165 = vmatpush.bf16.msra.mxu0 %v147
    %166 = vmatmul.bf16.gmra.mxu0 %v156
    %v167 = vpop.f32.mrf.mxu0
    %v168 = vadd.f32 %v129, %v167
    %v169 = vpop.f32.mrf.mxu0
    %170 = vdwg.mxu0
    %v171 = vmax.f32 %v168, 0.0
    %vm172 = vcmask 261120
    %173 = vst.msk [vmem:[#allocation2] sm:$0xff] %vm172, %v171
    // Predicated region
    $region30: #{tpu_custom_call.1} parent=1 // pred_check
      _
    $region31: #{tpu_custom_call.1} parent=1 // pred_check_branch
      %175 = sbr.rel (0) target = $region33
    $region32: #{tpu_custom_call.1} parent=1 // pred_region
      %177 = vsyncadd [#allocation3], 0
      %s179 = sshll.u32 [#allocation2], 4
      %s180 = int_to_ptr.vmem [resolvable:$true] %s179
      %s181 = sshll.u32 %s7, 4
      %s182 = int_to_ptr.hbm [resolvable:$true] %s181
      %184 = dma.vmem_to_hbm [thread:$0]  %s180, 128, %s182, [#allocation3]
    $region33: #{tpu_custom_call.1} parent=1 // pred_fallthru
      _
    // Predicated region
    $region34: #{tpu_custom_call.1} parent=1 // pred_check
      _
    $region35: #{tpu_custom_call.1} parent=1 // pred_check_branch
      %186 = sbr.rel (0) target = $region37
    $region36: #{tpu_custom_call.1} parent=1 // pred_region
      %188 = dma.done [#allocation3], 128
    $region37: #{tpu_custom_call.1} parent=1 // pred_fallthru
      _
    %189 = vsyncpa [#allocation3], 1

</llo_original>
